<compile_context>
chip_gen: v7x
topology: tpu7x:2x2x1
jax: 0.10.0
libtpu: 0.0.40
codegen_flags: <defaults>
</compile_context>

<pallas_src>
import jax
import jax.numpy as jnp
from jax.experimental import pallas as pl
from jax.experimental.pallas import tpu as pltpu


def _cdiv(a, b):
    return -(-a // b)


def _round_up(a, b):
    return _cdiv(a, b) * b


def _make_kernel(num_classes, s_tile, needs_mask):
    """Kernel for one (batch, shard, spatial-tile) grid step.

    x_ref:     (1, C, S, 128) logits block (native dtype), class axis leading.
    t_ref:     (1, 1, S, 128) int32 targets (-1 marks padded pixels).
    ce_ref:    (1, 1, 8, 128) f32 lane-dense CE partial-sum accumulator (resident).
    inter_ref: (1, 1, C, 8, 128) f32 per-class intersection partial sums (resident).
    union_ref: (1, 1, C, 8, 128) f32 per-class union partial sums (resident).
    """

    def kernel(x_ref, t_ref, ce_ref, inter_ref, union_ref):
        h = pl.program_id(2)

        @pl.when(h == 0)
        def _init():
            ce_ref[...] = jnp.zeros_like(ce_ref)
            inter_ref[...] = jnp.zeros_like(inter_ref)
            union_ref[...] = jnp.zeros_like(union_ref)

        xb = x_ref[0].astype(jnp.float32)            # (C, S, 128) upcast per-tile
        tb = t_ref[0]                                # (1, S, 128) int32

        # ---- softmax / logsumexp over the leading class axis (VALU/EUP only) ----
        m = jnp.max(xb, axis=0, keepdims=True)       # (1, S, 128)
        e = jnp.exp(xb - m)                          # (C, S, 128)
        s = jnp.sum(e, axis=0, keepdims=True)        # (1, S, 128)
        inv = pl.reciprocal(s, approx=True)          # EUP slot
        inv = inv * (2.0 - s * inv)                  # one Newton step -> ~f32 accuracy
        p = e * inv                                  # softmax probs (C, S, 128)
        lse = m + jnp.log(s)                         # (1, S, 128)

        # ---- one-hot pick via compare/select (no float one-hot temporary) ----
        cls = jax.lax.broadcasted_iota(jnp.int32, (num_classes, s_tile, 128), 0)
        onehot = cls == tb                           # bool (C, S, 128)
        picked = jnp.sum(jnp.where(onehot, xb, 0.0), axis=0, keepdims=True)
        ce_contrib = lse - picked                    # (1, S, 128)

        if needs_mask:
            valid = tb >= 0                          # padded pixels carry target = -1
            ce_contrib = jnp.where(valid, ce_contrib, 0.0)
            p = jnp.where(valid, p, 0.0)

        # ---- lane-dense partial sums: reduce only the leading sublane-block axis ----
        # (pure vreg-vs-vreg VALU adds; cross-sublane/lane reduction deferred to epilogue)
        sub = s_tile // 8
        ce_ref[0, 0] += jnp.sum(ce_contrib.reshape(sub, 8, 128), axis=0)
        inter_ref[0, 0] += jnp.sum(
            jnp.where(onehot, p, 0.0).reshape(num_classes, sub, 8, 128), axis=1)
        union_ref[0, 0] += jnp.sum(
            jnp.where(onehot, p + 1.0, p).reshape(num_classes, sub, 8, 128), axis=1)

    return kernel


def dice_cross_entropy_loss(logits_nchw, target_bhw, weight_dice=0.5, smooth=1e-6):
    """logits_nchw: (B, C, H, W) float; target_bhw: (B, H, W) int class labels."""
    B, C, H, W = logits_nchw.shape
    HW = H * W
    x_itemsize = jnp.dtype(logits_nchw.dtype).itemsize

    # ---- generation-aware tile sizing -------------------------------------------------
    try:
        vmem_cap = int(getattr(pltpu.get_tpu_info(), "vmem_capacity_bytes",
                               64 * 1024 * 1024))
    except Exception:
        vmem_cap = 64 * 1024 * 1024  # conservative (v7x per-core)
    # budget for the f32 compute footprint of one logits tile
    max_block_bytes = (4 * 1024 * 1024 if vmem_cap >= 100 * 1024 * 1024
                       else 2 * 1024 * 1024)

    s_cover = _cdiv(HW, 128)                                     # sublane rows needed
    s_budget = max(8, (max_block_bytes // (4 * C * 128)) // 8 * 8)
    s_tile = min(s_budget, _round_up(s_cover, 8))                # multiple of 8

    num_tiles = _cdiv(s_cover, s_tile)
    # v7x: with B == 1 only one "parallel" batch step exists -> split the spatial
    # reduction over a second parallel axis so both TensorCores get work.
    num_shards = 2 if (B == 1 and num_tiles >= 2) else 1
    num_tiles = _round_up(num_tiles, num_shards)
    tiles_per_shard = num_tiles // num_shards

    s_total = num_tiles * s_tile
    HW_pad = s_total * 128
    needs_mask = HW_pad != HW

    # ---- free reshapes of the native NCHW layout (pad only when HW is awkward) --------
    x = logits_nchw.reshape(B, C, HW)                            # native dtype, no cast
    t = target_bhw.reshape(B, 1, HW).astype(jnp.int32)
    if needs_mask:
        x = jnp.pad(x, ((0, 0), (0, 0), (0, HW_pad - HW)))
        t = jnp.pad(t, ((0, 0), (0, 0), (0, HW_pad - HW)), constant_values=-1)
    x = x.reshape(B, C, s_total, 128)
    t = t.reshape(B, 1, s_total, 128)

    # ---- corrected VMEM budget: 2x double-buffered inputs + ~8 tile-sized f32 temps ---
    x_block = C * s_tile * 128 * x_itemsize
    t_block = s_tile * 128 * 4
    f32_tile = C * s_tile * 128 * 4
    vmem_need = 2 * 2 * (x_block + t_block) + 8 * f32_tile + (2 << 20)
    vmem_limit = int(min(max(vmem_need, 16 * 1024 * 1024),
                         max(vmem_cap - 8 * 1024 * 1024, 32 * 1024 * 1024)))

    kernel = _make_kernel(C, s_tile, needs_mask)

    ce_out, inter_out, union_out = pl.pallas_call(
        kernel,
        out_shape=(
            jax.ShapeDtypeStruct((B, num_shards, 8, 128), jnp.float32),
            jax.ShapeDtypeStruct((B, num_shards, C, 8, 128), jnp.float32),
            jax.ShapeDtypeStruct((B, num_shards, C, 8, 128), jnp.float32),
        ),
        grid_spec=pltpu.PrefetchScalarGridSpec(
            num_scalar_prefetch=0,
            grid=(B, num_shards, tiles_per_shard),
            in_specs=[
                pl.BlockSpec((1, C, s_tile, 128),
                             lambda b, s, h: (b, 0, s * tiles_per_shard + h, 0)),
                pl.BlockSpec((1, 1, s_tile, 128),
                             lambda b, s, h: (b, 0, s * tiles_per_shard + h, 0)),
            ],
            out_specs=[
                pl.BlockSpec((1, 1, 8, 128), lambda b, s, h: (b, s, 0, 0)),
                pl.BlockSpec((1, 1, C, 8, 128), lambda b, s, h: (b, s, 0, 0, 0)),
                pl.BlockSpec((1, 1, C, 8, 128), lambda b, s, h: (b, s, 0, 0, 0)),
            ],
        ),
        compiler_params=pltpu.CompilerParams(
            dimension_semantics=("parallel", "parallel", "arbitrary"),
            vmem_limit_bytes=vmem_limit),
    )(x, t)

    # ---- tiny JAX epilogue on the lane-dense partials ----------------------------------
    ce = jnp.sum(ce_out) / jnp.float32(B * HW)                   # mean over real pixels
    inter = jnp.sum(inter_out, axis=(1, 3, 4))                   # (B, C)
    union = jnp.sum(union_out, axis=(1, 3, 4))                   # (B, C)
    dice = 2.0 * inter / (union + smooth)
    dice_l = 1.0 - jnp.mean(dice)
    return (1.0 - weight_dice) * ce + weight_dice * dice_l


def _reference_loss(logits_nchw, target_bhw, weight_dice=0.5, smooth=1e-6):
    """Pure-JAX reference mirroring the PyTorch semantics."""
    B, C, H, W = logits_nchw.shape
    x = jnp.transpose(logits_nchw, (0, 2, 3, 1)).reshape(B, H * W, C).astype(jnp.float32)
    t = target_bhw.reshape(B, H * W)
    lse = jax.scipy.special.logsumexp(x, axis=-1)
    picked = jnp.take_along_axis(x, t[..., None], axis=-1)[..., 0]
    ce = jnp.mean(lse - picked)
    p = jax.nn.softmax(x, axis=-1)
    onehot = jax.nn.one_hot(t, C, dtype=jnp.float32)
    inter = jnp.sum(p * onehot, axis=1)
    union = jnp.sum(p, axis=1) + jnp.sum(onehot, axis=1)
    dice = 2.0 * inter / (union + smooth)
    dice_l = 1.0 - jnp.mean(dice)
    return (1.0 - weight_dice) * ce + weight_dice * dice_l


if __name__ == "__main__":
    B, C, H, W = 2, 4, 16, 16
    key = jax.random.PRNGKey(0)
    k_logits, k_target = jax.random.split(key)
    logits = jax.random.normal(k_logits, (B, C, H, W), dtype=jnp.float32)
    target = jax.random.randint(k_target, (B, H, W), 0, C, dtype=jnp.int32)

    loss = dice_cross_entropy_loss(logits, target)
    loss = jax.block_until_ready(loss)

    ref = _reference_loss(logits, target)
    assert jnp.allclose(loss, ref, rtol=1e-4, atol=1e-4), (loss, ref)

    print("KERNEL_OK")
</pallas_src>

<mosaic_0001>
module attributes {stable_mosaic.version = 11 : i64} {
  func.func @kernel(%arg0: i32, %arg1: i32, %arg2: i32, %arg3: memref<1x4x8x128xf32, #tpu.memory_space<vmem>>, %arg4: memref<1x1x8x128xi32, #tpu.memory_space<vmem>>, %arg5: memref<1x1x8x128xf32, #tpu.memory_space<vmem>>, %arg6: memref<1x1x4x8x128xf32, #tpu.memory_space<vmem>>, %arg7: memref<1x1x4x8x128xf32, #tpu.memory_space<vmem>>) attributes {dimension_semantics = [#tpu.dimension_semantics<parallel>, #tpu.dimension_semantics<parallel>, #tpu.dimension_semantics<arbitrary>], iteration_bounds = array<i64: 2, 1, 1>, scalar_prefetch = 0 : i64, scratch_operands = 0 : i64, tpu.core_type = #tpu.core_type<tc>, window_params = [{transform_indices = @transform_0, window_bounds = array<i64: 1, 4, 8, 128>}, {transform_indices = @transform_1, window_bounds = array<i64: 1, 1, 8, 128>}, {transform_indices = @transform_2, window_bounds = array<i64: 1, 1, 8, 128>}, {transform_indices = @transform_3, window_bounds = array<i64: 1, 1, 4, 8, 128>}, {transform_indices = @transform_4, window_bounds = array<i64: 1, 1, 4, 8, 128>}]} {
    %c0_i32 = arith.constant 0 : i32
    %0 = arith.cmpi eq, %arg2, %c0_i32 : i32
    %1 = arith.extui %0 : i1 to i32
    %c0_i32_0 = arith.constant 0 : i32
    %2 = arith.cmpi ne, %1, %c0_i32_0 : i32
    scf.if %2 {
      %cst_48 = arith.constant 0.000000e+00 : f32
      %67 = vector.broadcast %cst_48 : f32 to vector<1x1x8x128xf32>
      %c0_49 = arith.constant 0 : index
      %c0_50 = arith.constant 0 : index
      %c0_51 = arith.constant 0 : index
      %c0_52 = arith.constant 0 : index
      %68 = vector.load %arg5[%c0_49, %c0_50, %c0_51, %c0_52] : memref<1x1x8x128xf32, #tpu.memory_space<vmem>>, vector<1x1x8x128xf32>
      tpu.vector_store %arg5[%c0_49, %c0_50, %c0_51, %c0_52], %67 {strides = array<i32>} : memref<1x1x8x128xf32, #tpu.memory_space<vmem>>, vector<1x1x8x128xf32>,
      %cst_53 = arith.constant 0.000000e+00 : f32
      %69 = vector.broadcast %cst_53 : f32 to vector<1x1x4x8x128xf32>
      %c0_54 = arith.constant 0 : index
      %c0_55 = arith.constant 0 : index
      %c0_56 = arith.constant 0 : index
      %c0_57 = arith.constant 0 : index
      %c0_58 = arith.constant 0 : index
      %70 = vector.load %arg6[%c0_54, %c0_55, %c0_56, %c0_57, %c0_58] : memref<1x1x4x8x128xf32, #tpu.memory_space<vmem>>, vector<1x1x4x8x128xf32>
      tpu.vector_store %arg6[%c0_54, %c0_55, %c0_56, %c0_57, %c0_58], %69 {strides = array<i32>} : memref<1x1x4x8x128xf32, #tpu.memory_space<vmem>>, vector<1x1x4x8x128xf32>,
      %cst_59 = arith.constant 0.000000e+00 : f32
      %71 = vector.broadcast %cst_59 : f32 to vector<1x1x4x8x128xf32>
      %c0_60 = arith.constant 0 : index
      %c0_61 = arith.constant 0 : index
      %c0_62 = arith.constant 0 : index
      %c0_63 = arith.constant 0 : index
      %c0_64 = arith.constant 0 : index
      %72 = vector.load %arg7[%c0_60, %c0_61, %c0_62, %c0_63, %c0_64] : memref<1x1x4x8x128xf32, #tpu.memory_space<vmem>>, vector<1x1x4x8x128xf32>
      tpu.vector_store %arg7[%c0_60, %c0_61, %c0_62, %c0_63, %c0_64], %71 {strides = array<i32>} : memref<1x1x4x8x128xf32, #tpu.memory_space<vmem>>, vector<1x1x4x8x128xf32>,
    } else {
    }
    %c0 = arith.constant 0 : index
    %c0_1 = arith.constant 0 : index
    %c0_2 = arith.constant 0 : index
    %c0_3 = arith.constant 0 : index
    %3 = vector.load %arg3[%c0, %c0_1, %c0_2, %c0_3] : memref<1x4x8x128xf32, #tpu.memory_space<vmem>>, vector<1x4x8x128xf32>
    %4 = vector.shape_cast %3 : vector<1x4x8x128xf32> to vector<4x8x128xf32>
    %c0_4 = arith.constant 0 : index
    %c0_5 = arith.constant 0 : index
    %c0_6 = arith.constant 0 : index
    %c0_7 = arith.constant 0 : index
    %5 = vector.load %arg4[%c0_4, %c0_5, %c0_6, %c0_7] : memref<1x1x8x128xi32, #tpu.memory_space<vmem>>, vector<1x1x8x128xi32>
    %6 = vector.shape_cast %5 : vector<1x1x8x128xi32> to vector<1x8x128xi32>
    %cst = arith.constant dense<0xFF800000> : vector<8x128xf32>
    %7 = vector.multi_reduction <maximumf>, %4, %cst [0] : vector<4x8x128xf32> to vector<8x128xf32>
    %8 = vector.shape_cast %7 : vector<8x128xf32> to vector<1x8x128xf32>
    %9 = vector.broadcast %8 : vector<1x8x128xf32> to vector<4x8x128xf32>
    %10 = arith.subf %4, %9 : vector<4x8x128xf32>
    %11 = math.exp %10 : vector<4x8x128xf32>
    %cst_8 = arith.constant dense<0.000000e+00> : vector<8x128xf32>
    %12 = vector.multi_reduction <add>, %11, %cst_8 [0] : vector<4x8x128xf32> to vector<8x128xf32>
    %13 = vector.shape_cast %12 : vector<8x128xf32> to vector<1x8x128xf32>
    %14 = tpu.reciprocal %13 {approx = true} : vector<1x8x128xf32> -> vector<1x8x128xf32>
    %15 = arith.mulf %13, %14 : vector<1x8x128xf32>
    %cst_9 = arith.constant 2.000000e+00 : f32
    %16 = vector.broadcast %cst_9 : f32 to vector<1x8x128xf32>
    %17 = arith.subf %16, %15 : vector<1x8x128xf32>
    %18 = arith.mulf %14, %17 : vector<1x8x128xf32>
    %19 = vector.broadcast %18 : vector<1x8x128xf32> to vector<4x8x128xf32>
    %20 = arith.mulf %11, %19 : vector<4x8x128xf32>
    %21 = math.log %13 : vector<1x8x128xf32>
    %22 = arith.addf %8, %21 : vector<1x8x128xf32>
    %23 = tpu.iota {dimensions = array<i32: 0>} : vector<4x8x128xi32>
    %24 = vector.broadcast %6 : vector<1x8x128xi32> to vector<4x8x128xi32>
    %25 = arith.cmpi eq, %23, %24 : vector<4x8x128xi32>
    %cst_10 = arith.constant 0.000000e+00 : f32
    %26 = vector.broadcast %cst_10 : f32 to vector<4x8x128xf32>
    %27 = arith.select %25, %4, %26 : vector<4x8x128xi1>, vector<4x8x128xf32>
    %cst_11 = arith.constant dense<0.000000e+00> : vector<8x128xf32>
    %28 = vector.multi_reduction <add>, %27, %cst_11 [0] : vector<4x8x128xf32> to vector<8x128xf32>
    %29 = vector.shape_cast %28 : vector<8x128xf32> to vector<1x8x128xf32>
    %30 = arith.subf %22, %29 : vector<1x8x128xf32>
    %c0_i32_12 = arith.constant 0 : i32
    %31 = vector.broadcast %c0_i32_12 : i32 to vector<1x8x128xi32>
    %32 = arith.cmpi sge, %6, %31 : vector<1x8x128xi32>
    %cst_13 = arith.constant 0.000000e+00 : f32
    %33 = vector.broadcast %cst_13 : f32 to vector<1x8x128xf32>
    %34 = arith.select %32, %30, %33 : vector<1x8x128xi1>, vector<1x8x128xf32>
    %cst_14 = arith.constant 0.000000e+00 : f32
    %35 = vector.shape_cast %32 : vector<1x8x128xi1> to vector<1x8x128xi1>
    %36 = vector.broadcast %35 : vector<1x8x128xi1> to vector<4x8x128xi1>
    %37 = vector.broadcast %cst_14 : f32 to vector<4x8x128xf32>
    %38 = arith.select %36, %20, %37 : vector<4x8x128xi1>, vector<4x8x128xf32>
    %c0_15 = arith.constant 0 : index
    %c0_16 = arith.constant 0 : index
    %c0_17 = arith.constant 0 : index
    %c0_18 = arith.constant 0 : index
    %39 = vector.load %arg5[%c0_15, %c0_16, %c0_17, %c0_18] : memref<1x1x8x128xf32, #tpu.memory_space<vmem>>, vector<1x1x8x128xf32>
    %40 = vector.shape_cast %39 : vector<1x1x8x128xf32> to vector<8x128xf32>
    %cst_19 = arith.constant dense<0.000000e+00> : vector<8x128xf32>
    %41 = vector.multi_reduction <add>, %34, %cst_19 [0] : vector<1x8x128xf32> to vector<8x128xf32>
    %42 = arith.addf %40, %41 : vector<8x128xf32>
    %c0_20 = arith.constant 0 : index
    %c0_21 = arith.constant 0 : index
    %c0_22 = arith.constant 0 : index
    %c0_23 = arith.constant 0 : index
    %43 = vector.load %arg5[%c0_20, %c0_21, %c0_22, %c0_23] : memref<1x1x8x128xf32, #tpu.memory_space<vmem>>, vector<1x1x8x128xf32>
    %44 = vector.shape_cast %43 : vector<1x1x8x128xf32> to vector<8x128xf32>
    %45 = vector.shape_cast %42 : vector<8x128xf32> to vector<1x1x8x128xf32>
    tpu.vector_store %arg5[%c0_20, %c0_21, %c0_22, %c0_23], %45 {strides = array<i32>} : memref<1x1x8x128xf32, #tpu.memory_space<vmem>>, vector<1x1x8x128xf32>,
    %c0_24 = arith.constant 0 : index
    %c0_25 = arith.constant 0 : index
    %c0_26 = arith.constant 0 : index
    %c0_27 = arith.constant 0 : index
    %c0_28 = arith.constant 0 : index
    %46 = vector.load %arg6[%c0_24, %c0_25, %c0_26, %c0_27, %c0_28] : memref<1x1x4x8x128xf32, #tpu.memory_space<vmem>>, vector<1x1x4x8x128xf32>
    %47 = vector.shape_cast %46 : vector<1x1x4x8x128xf32> to vector<4x8x128xf32>
    %cst_29 = arith.constant 0.000000e+00 : f32
    %48 = vector.broadcast %cst_29 : f32 to vector<4x8x128xf32>
    %49 = arith.select %25, %38, %48 : vector<4x8x128xi1>, vector<4x8x128xf32>
    %50 = vector.shape_cast %49 : vector<4x8x128xf32> to vector<4x1x8x128xf32>
    %cst_30 = arith.constant dense<0.000000e+00> : vector<4x8x128xf32>
    %51 = vector.multi_reduction <add>, %50, %cst_30 [1] : vector<4x1x8x128xf32> to vector<4x8x128xf32>
    %52 = arith.addf %47, %51 : vector<4x8x128xf32>
    %c0_31 = arith.constant 0 : index
    %c0_32 = arith.constant 0 : index
    %c0_33 = arith.constant 0 : index
    %c0_34 = arith.constant 0 : index
    %c0_35 = arith.constant 0 : index
    %53 = vector.load %arg6[%c0_31, %c0_32, %c0_33, %c0_34, %c0_35] : memref<1x1x4x8x128xf32, #tpu.memory_space<vmem>>, vector<1x1x4x8x128xf32>
    %54 = vector.shape_cast %53 : vector<1x1x4x8x128xf32> to vector<4x8x128xf32>
    %55 = vector.shape_cast %52 : vector<4x8x128xf32> to vector<1x1x4x8x128xf32>
    tpu.vector_store %arg6[%c0_31, %c0_32, %c0_33, %c0_34, %c0_35], %55 {strides = array<i32>} : memref<1x1x4x8x128xf32, #tpu.memory_space<vmem>>, vector<1x1x4x8x128xf32>,
    %c0_36 = arith.constant 0 : index
    %c0_37 = arith.constant 0 : index
    %c0_38 = arith.constant 0 : index
    %c0_39 = arith.constant 0 : index
    %c0_40 = arith.constant 0 : index
    %56 = vector.load %arg7[%c0_36, %c0_37, %c0_38, %c0_39, %c0_40] : memref<1x1x4x8x128xf32, #tpu.memory_space<vmem>>, vector<1x1x4x8x128xf32>
    %57 = vector.shape_cast %56 : vector<1x1x4x8x128xf32> to vector<4x8x128xf32>
    %cst_41 = arith.constant 1.000000e+00 : f32
    %58 = vector.broadcast %cst_41 : f32 to vector<4x8x128xf32>
    %59 = arith.addf %38, %58 : vector<4x8x128xf32>
    %60 = arith.select %25, %59, %38 : vector<4x8x128xi1>, vector<4x8x128xf32>
    %61 = vector.shape_cast %60 : vector<4x8x128xf32> to vector<4x1x8x128xf32>
    %cst_42 = arith.constant dense<0.000000e+00> : vector<4x8x128xf32>
    %62 = vector.multi_reduction <add>, %61, %cst_42 [1] : vector<4x1x8x128xf32> to vector<4x8x128xf32>
    %63 = arith.addf %57, %62 : vector<4x8x128xf32>
    %c0_43 = arith.constant 0 : index
    %c0_44 = arith.constant 0 : index
    %c0_45 = arith.constant 0 : index
    %c0_46 = arith.constant 0 : index
    %c0_47 = arith.constant 0 : index
    %64 = vector.load %arg7[%c0_43, %c0_44, %c0_45, %c0_46, %c0_47] : memref<1x1x4x8x128xf32, #tpu.memory_space<vmem>>, vector<1x1x4x8x128xf32>
    %65 = vector.shape_cast %64 : vector<1x1x4x8x128xf32> to vector<4x8x128xf32>
    %66 = vector.shape_cast %63 : vector<4x8x128xf32> to vector<1x1x4x8x128xf32>
    tpu.vector_store %arg7[%c0_43, %c0_44, %c0_45, %c0_46, %c0_47], %66 {strides = array<i32>} : memref<1x1x4x8x128xf32, #tpu.memory_space<vmem>>, vector<1x1x4x8x128xf32>,
    return
  }
  func.func @transform_0(%arg0: i32, %arg1: i32, %arg2: i32) -> (i32, i32, i32, i32) {
    %c1_i32 = arith.constant 1 : i32
    %0 = arith.muli %arg1, %c1_i32 : i32
    %1 = arith.addi %0, %arg2 : i32
    %c0_i32 = arith.constant 0 : i32
    %c0_i32_0 = arith.constant 0 : i32
    %c0_i32_1 = arith.constant 0 : i32
    return %arg0, %c0_i32, %1, %c0_i32_0 : i32, i32, i32, i32
  }
  func.func @transform_1(%arg0: i32, %arg1: i32, %arg2: i32) -> (i32, i32, i32, i32) {
    %c1_i32 = arith.constant 1 : i32
    %0 = arith.muli %arg1, %c1_i32 : i32
    %1 = arith.addi %0, %arg2 : i32
    %c0_i32 = arith.constant 0 : i32
    %c0_i32_0 = arith.constant 0 : i32
    %c0_i32_1 = arith.constant 0 : i32
    return %arg0, %c0_i32, %1, %c0_i32_0 : i32, i32, i32, i32
  }
  func.func @transform_2(%arg0: i32, %arg1: i32, %arg2: i32) -> (i32, i32, i32, i32) {
    %c0_i32 = arith.constant 0 : i32
    %c0_i32_0 = arith.constant 0 : i32
    %c0_i32_1 = arith.constant 0 : i32
    return %arg0, %arg1, %c0_i32, %c0_i32_0 : i32, i32, i32, i32
  }
  func.func @transform_3(%arg0: i32, %arg1: i32, %arg2: i32) -> (i32, i32, i32, i32, i32) {
    %c0_i32 = arith.constant 0 : i32
    %c0_i32_0 = arith.constant 0 : i32
    %c0_i32_1 = arith.constant 0 : i32
    %c0_i32_2 = arith.constant 0 : i32
    return %arg0, %arg1, %c0_i32, %c0_i32_0, %c0_i32_1 : i32, i32, i32, i32, i32
  }
  func.func @transform_4(%arg0: i32, %arg1: i32, %arg2: i32) -> (i32, i32, i32, i32, i32) {
    %c0_i32 = arith.constant 0 : i32
    %c0_i32_0 = arith.constant 0 : i32
    %c0_i32_1 = arith.constant 0 : i32
    %c0_i32_2 = arith.constant 0 : i32
    return %arg0, %arg1, %c0_i32, %c0_i32_0, %c0_i32_1 : i32, i32, i32, i32, i32
  }
}

</mosaic_0001>

<llo_original>
// kernel: tpu_custom_call.1
$region0: #{tpu_custom_call.1}
  #allocation0 [shape = 'u32[]', space=smem, size = 0x4, offset = 0x4, fixed_abs, tag = 'smem constant byte address 0x4 - core index']
  #allocation1 [shape = 'u32[144,128]{1,0:T(1,128)}', space=vmem, size = 0x12000, scoped, tag = 'internal scratch']
  %s0 = inlined_call_operand.hbm [shape: f32[2,4,8,128], index: 0, kind: input, shape index: {}]
  %s1 = inlined_call_operand.hbm [shape: s32[2,1,8,128], index: 1, kind: input, shape index: {}]
  %s2 = inlined_call_operand.hbm [shape: f32[2,1,8,128], index: 2, kind: output, shape index: {0}]
  %s3 = inlined_call_operand.hbm [shape: f32[2,1,4,8,128], index: 3, kind: output, shape index: {1}]
  %s4 = inlined_call_operand.hbm [shape: f32[2,1,4,8,128], index: 4, kind: output, shape index: {2}]
  %5 = xla_tuple %s2, %s3, %s4
  %s6 = sld [smem:[#allocation0]]
  $region69: #{tpu_custom_call.1} parent=0
    _
  %s8 = ssub.s32 1, %s6
  %s9 = scalar_select 0, %s8, %s6
  $region1: #{tpu_custom_call.1} parent=0
    #allocation2 [shape = 'u8[32768]{0}', space=vmem, size = 0x8000, scoped, tag = 'input window, operand 0']
    #allocation3 [shape = 's32[2]{0}', space=sflag, size = 0x8, scoped, tag = 'scoped memory for tpu_custom_call.1']
    #allocation4 [shape = 's32[2]{0}', space=sflag, size = 0x8, scoped, tag = 'scoped memory for tpu_custom_call.1']
    #allocation5 [shape = 'u8[8192]{0}', space=vmem, size = 0x2000, scoped, tag = 'input window, operand 1']
    #allocation6 [shape = 's32[2]{0}', space=sflag, size = 0x8, scoped, tag = 'scoped memory for tpu_custom_call.1']
    #allocation7 [shape = 'u8[8192]{0}', space=vmem, size = 0x2000, scoped, tag = 'output window, operand 0']
    #allocation8 [shape = 'u8[32768]{0}', space=vmem, size = 0x8000, scoped, tag = 'output window, operand 1']
    #allocation9 [shape = 's32[2]{0}', space=sflag, size = 0x8, scoped, tag = 'scoped memory for tpu_custom_call.1']
    #allocation10 [shape = 'u8[32768]{0}', space=vmem, size = 0x8000, scoped, tag = 'output window, operand 2']
    %10 = vsyncpa [#allocation3], 0
    %s11 = scalar_lea.sflag [#allocation3], 1
    %12 = vsyncpa %s11, 0
    %13 = vsyncpa [#allocation6], 0
    %s14 = scalar_lea.sflag [#allocation6], 1
    %15 = vsyncpa %s14, 0
    %16 = vsyncpa [#allocation4], 0
    %s17 = scalar_lea.sflag [#allocation4], 1
    %18 = vsyncpa %s17, 0
    %19 = vsyncpa [#allocation9], 0
    %s20 = scalar_lea.sflag [#allocation9], 1
    %21 = vsyncpa %s20, 0
    loop: start=0, step=1, limit=4
    $region2: #{tpu_custom_call.1} parent=1 // loop_pre_header
      _
    $region3: #{tpu_custom_call.1} parent=1 // loop_header
      %s23 = sphi 0, %s27
      %p24 = scmp.ge.s32.totalorder %s23, 4
      %s30 = sphi 0, %s49
      %s31 = sphi 0, %s45
      %s32 = sphi 0, %s41
      %s33 = sphi 0, %s30
      %s34 = sphi 0, %s31
      %s35 = sphi 0, %s32
      %s36 = sphi 0, %s33
      %s37 = sphi 0, %s34
      %s38 = sphi 0, %s35
      %s56 = sphi 0, %s58
      %s59 = sphi 0, %s56
      %s60 = sphi 0, %s59
      %s76 = sphi 0, %s60
      %s86 = sphi 0, %s88
      %s89 = sphi 0, %s86
      %s90 = sphi 0, %s89
      %s106 = sphi 0, %s90
      %s114 = sphi 0, %s116
      %s117 = sphi 0, %s114
      %s118 = sphi 0, %s117
      %s134 = sphi 0, %s118
      %s142 = sphi 0, %s144
      %s145 = sphi 0, %s142
      %s146 = sphi 0, %s145
      %s162 = sphi 0, %s146
      %s170 = sphi 0, %s172
      %s173 = sphi 0, %s170
      %s174 = sphi 0, %s173
      %s190 = sphi 0, %s174
    $region4: #{tpu_custom_call.1} parent=1 // loop_header_branch
      %26 = sbr.rel (%p24) target = $region8
    $region5: #{tpu_custom_call.1} parent=1 // loop_body
      %s28 = ssub.s32 %s23, 1
      %s29 = ssub.s32 %s23, 2
      %s39 = sadd.s32 1, %s32
      %p40 = scmp.ge.s32.totalorder %s39, 1
      %s41 = scalar_select %p40, 0, %s39
      %s42 = sadd.s32 1, %s31
      %s43 = scalar_select %p40, %s42, %s31
      %p44 = scmp.ge.s32.totalorder %s43, 1
      %s45 = scalar_select %p44, 0, %s43
      %s46 = sadd.s32 1, %s30
      %s47 = scalar_select %p44, %s46, %s30
      %p48 = scmp.ge.s32.totalorder %s47, 2
      %s49 = scalar_select %p48, 0, %s47
      %s50 = sadd.s32 %s31, %s32
      %s51 = sadd.s32 %s45, %s41
      %s52 = ssub.s32 %s30, %s49
      %s53 = ssub.s32 %s50, %s51
      %s54 = sor.u32 %s52, %s53
      %p55 = scmp.eq.s32.totalorder %s54, 0
      %s57 = sadd.s32 %s56, 1
      %s58 = scalar_select %p55, %s56, %s57
      %p61 = pneg %p55
      %p62 = scmp.eq.s32.totalorder %s23, 1
      %p63 = por %p61, %p62
      %p64 = scmp.ne.s32.totalorder %s56, %s59
      %p65 = scmp.eq.s32.totalorder %s23, 0
      %p66 = por %p64, %p65
      %p67 = scmp.ne.s32.totalorder %s56, %s59
      %p68 = scmp.eq.s32.totalorder %s28, 1
      %p69 = por %p67, %p68
      %p70 = scmp.ne.s32.totalorder %s59, %s60
      %p71 = scmp.eq.s32.totalorder %s28, 0
      %p72 = por %p70, %p71
      %p73 = scmp.ne.s32.totalorder %s59, %s60
      %p74 = scmp.eq.s32.totalorder %s29, 1
      %p75 = por %p73, %p74
      %p77 = scmp.ne.s32.totalorder %s60, %s76
      %p78 = scmp.eq.s32.totalorder %s29, 0
      %p79 = por %p77, %p78
      %s80 = sadd.s32 %s31, %s32
      %s81 = sadd.s32 %s45, %s41
      %s82 = ssub.s32 %s30, %s49
      %s83 = ssub.s32 %s80, %s81
      %s84 = sor.u32 %s82, %s83
      %p85 = scmp.eq.s32.totalorder %s84, 0
      %s87 = sadd.s32 %s86, 1
      %s88 = scalar_select %p85, %s86, %s87
      %p91 = pneg %p85
      %p92 = scmp.eq.s32.totalorder %s23, 1
      %p93 = por %p91, %p92
      %p94 = scmp.ne.s32.totalorder %s86, %s89
      %p95 = scmp.eq.s32.totalorder %s23, 0
      %p96 = por %p94, %p95
      %p97 = scmp.ne.s32.totalorder %s86, %s89
      %p98 = scmp.eq.s32.totalorder %s28, 1
      %p99 = por %p97, %p98
      %p100 = scmp.ne.s32.totalorder %s89, %s90
      %p101 = scmp.eq.s32.totalorder %s28, 0
      %p102 = por %p100, %p101
      %p103 = scmp.ne.s32.totalorder %s89, %s90
      %p104 = scmp.eq.s32.totalorder %s29, 1
      %p105 = por %p103, %p104
      %p107 = scmp.ne.s32.totalorder %s90, %s106
      %p108 = scmp.eq.s32.totalorder %s29, 0
      %p109 = por %p107, %p108
      %s110 = ssub.s32 %s30, %s49
      %s111 = ssub.s32 %s31, %s45
      %s112 = sor.u32 %s110, %s111
      %p113 = scmp.eq.s32.totalorder %s112, 0
      %s115 = sadd.s32 %s114, 1
      %s116 = scalar_select %p113, %s114, %s115
      %p119 = pneg %p113
      %p120 = scmp.eq.s32.totalorder %s23, 1
      %p121 = por %p119, %p120
      %p122 = scmp.ne.s32.totalorder %s114, %s117
      %p123 = scmp.eq.s32.totalorder %s23, 0
      %p124 = por %p122, %p123
      %p125 = scmp.ne.s32.totalorder %s114, %s117
      %p126 = scmp.eq.s32.totalorder %s28, 1
      %p127 = por %p125, %p126
      %p128 = scmp.ne.s32.totalorder %s117, %s118
      %p129 = scmp.eq.s32.totalorder %s28, 0
      %p130 = por %p128, %p129
      %p131 = scmp.ne.s32.totalorder %s117, %s118
      %p132 = scmp.eq.s32.totalorder %s29, 1
      %p133 = por %p131, %p132
      %p135 = scmp.ne.s32.totalorder %s118, %s134
      %p136 = scmp.eq.s32.totalorder %s29, 0
      %p137 = por %p135, %p136
      %s138 = ssub.s32 %s30, %s49
      %s139 = ssub.s32 %s31, %s45
      %s140 = sor.u32 %s138, %s139
      %p141 = scmp.eq.s32.totalorder %s140, 0
      %s143 = sadd.s32 %s142, 1
      %s144 = scalar_select %p141, %s142, %s143
      %p147 = pneg %p141
      %p148 = scmp.eq.s32.totalorder %s23, 1
      %p149 = por %p147, %p148
      %p150 = scmp.ne.s32.totalorder %s142, %s145
      %p151 = scmp.eq.s32.totalorder %s23, 0
      %p152 = por %p150, %p151
      %p153 = scmp.ne.s32.totalorder %s142, %s145
      %p154 = scmp.eq.s32.totalorder %s28, 1
      %p155 = por %p153, %p154
      %p156 = scmp.ne.s32.totalorder %s145, %s146
      %p157 = scmp.eq.s32.totalorder %s28, 0
      %p158 = por %p156, %p157
      %p159 = scmp.ne.s32.totalorder %s145, %s146
      %p160 = scmp.eq.s32.totalorder %s29, 1
      %p161 = por %p159, %p160
      %p163 = scmp.ne.s32.totalorder %s146, %s162
      %p164 = scmp.eq.s32.totalorder %s29, 0
      %p165 = por %p163, %p164
      %s166 = ssub.s32 %s30, %s49
      %s167 = ssub.s32 %s31, %s45
      %s168 = sor.u32 %s166, %s167
      %p169 = scmp.eq.s32.totalorder %s168, 0
      %s171 = sadd.s32 %s170, 1
      %s172 = scalar_select %p169, %s170, %s171
      %p175 = pneg %p169
      %p176 = scmp.eq.s32.totalorder %s23, 1
      %p177 = por %p175, %p176
      %p178 = scmp.ne.s32.totalorder %s170, %s173
      %p179 = scmp.eq.s32.totalorder %s23, 0
      %p180 = por %p178, %p179
      %p181 = scmp.ne.s32.totalorder %s170, %s173
      %p182 = scmp.eq.s32.totalorder %s28, 1
      %p183 = por %p181, %p182
      %p184 = scmp.ne.s32.totalorder %s173, %s174
      %p185 = scmp.eq.s32.totalorder %s28, 0
      %p186 = por %p184, %p185
      %p187 = scmp.ne.s32.totalorder %s173, %s174
      %p188 = scmp.eq.s32.totalorder %s29, 1
      %p189 = por %p187, %p188
      %p191 = scmp.ne.s32.totalorder %s174, %s190
      %p192 = scmp.eq.s32.totalorder %s29, 0
      %p193 = por %p191, %p192
      %p194 = scmp.le.s32.totalorder 1, %s23
      %p195 = scmp.lt.s32.totalorder %s23, 3
      %p196 = pnand %p194, %p195
      %p197 = pneg %p196
      // Predicated region
      $region9: #{tpu_custom_call.1} parent=5 // pred_check
        _
      $region10: #{tpu_custom_call.1} parent=5 // pred_check_branch
        %199 = sbr.rel (%p196) target = $region12
      $region11: #{tpu_custom_call.1} parent=5 // pred_region
        %s200 = ssub.s32 %s23, 1
      $region12: #{tpu_custom_call.1} parent=5 // pred_fallthru
        _
      %p201 = scmp.lt.s32.totalorder %s23, 2
      // Predicated region
      $region13: #{tpu_custom_call.1} parent=5 // pred_check
        %p202 = pneg %p201
      $region14: #{tpu_custom_call.1} parent=5 // pred_check_branch
        %204 = sbr.rel (%p202) target = $region16
      $region15: #{tpu_custom_call.1} parent=5 // pred_region
        // Predicated region
        $region17: #{tpu_custom_call.1} parent=15 // pred_check
          %p205 = pneg %p66
        $region18: #{tpu_custom_call.1} parent=15 // pred_check_branch
          %207 = sbr.rel (%p205) target = $region20
        $region19: #{tpu_custom_call.1} parent=15 // pred_region
          %s208 = sand.u32 %s56, 1
          %s209 = scalar_lea.sflag [#allocation3], %s208
          %s210 = sand.u32 %s56, 1
          %s211 = smul.addr %s210, 32
          %s212 = scalar_lea.vmem [#allocation2], %s211
          %s213 = sadd.s32 %s31, %s32
          %s215 = ssub.s32 512, 512
          %216 = vsyncadd %s209, %s215
          %s217 = smul.addr %s30, 4
          %s218 = sadd.s32 %s213, %s217
          %s219 = smul.addr %s218, 128
          %s220 = scalar_lea.hbm %s0, %s219
          %s221 = sshll.u32 %s212, 4
          %s222 = int_to_ptr.vmem [resolvable:$true] %s221
          %227 = dma.hbm_to_vmem [thread:$0]  %s220, 512, %s222, %s209, 128, 128, 8
        $region20: #{tpu_custom_call.1} parent=15 // pred_fallthru
          _
        // Predicated region
        $region21: #{tpu_custom_call.1} parent=15 // pred_check
          %p228 = pneg %p96
        $region22: #{tpu_custom_call.1} parent=15 // pred_check_branch
          %230 = sbr.rel (%p228) target = $region24
        $region23: #{tpu_custom_call.1} parent=15 // pred_region
          %s231 = sand.u32 %s86, 1
          %s232 = scalar_lea.sflag [#allocation6], %s231
          %s233 = sand.u32 %s86, 1
          %s234 = smul.addr %s233, 8
          %s235 = scalar_lea.vmem [#allocation5], %s234
          %s236 = sadd.s32 %s31, %s32
          %s238 = ssub.s32 128, 128
          %239 = vsyncadd %s232, %s238
          %s240 = sadd.s32 %s236, %s30
          %s241 = smul.addr %s240, 128
          %s242 = scalar_lea.hbm %s1, %s241
          %s244 = sshll.u32 %s235, 4
          %s245 = int_to_ptr.vmem [resolvable:$true] %s244
          %247 = dma.hbm_to_vmem [thread:$0]  %s242, 128, %s245, %s232
        $region24: #{tpu_custom_call.1} parent=15 // pred_fallthru
          _
      $region16: #{tpu_custom_call.1} parent=5 // pred_fallthru
        _
      %p248 = scmp.le.s32.totalorder 1, %s23
      %p249 = scmp.lt.s32.totalorder %s23, 3
      %p250 = pnand %p248, %p249
      %p251 = pneg %p250
      // Predicated region
      $region25: #{tpu_custom_call.1} parent=5 // pred_check
        _
      $region26: #{tpu_custom_call.1} parent=5 // pred_check_branch
        %253 = sbr.rel (%p250) target = $region28
      $region27: #{tpu_custom_call.1} parent=5 // pred_region
        %s254 = ssub.s32 %s23, 1
        %s255 = sand.u32 %s59, 1
        %s256 = scalar_lea.sflag [#allocation3], %s255
        %s257 = sand.u32 %s59, 1
        %s258 = smul.addr %s257, 32
        %s259 = scalar_lea.vmem [#allocation2], %s258
        // Predicated region
        $region29: #{tpu_custom_call.1} parent=27 // pred_check
          %p260 = pneg %p72
        $region30: #{tpu_custom_call.1} parent=27 // pred_check_branch
          %262 = sbr.rel (%p260) target = $region32
        $region31: #{tpu_custom_call.1} parent=27 // pred_region
          %263 = dma.done %s256, 512
        $region32: #{tpu_custom_call.1} parent=27 // pred_fallthru
          _
        %s264 = sand.u32 %s89, 1
        %s265 = scalar_lea.sflag [#allocation6], %s264
        %s266 = sand.u32 %s89, 1
        %s267 = smul.addr %s266, 8
        %s268 = scalar_lea.vmem [#allocation5], %s267
        // Predicated region
        $region33: #{tpu_custom_call.1} parent=27 // pred_check
          %p269 = pneg %p102
        $region34: #{tpu_custom_call.1} parent=27 // pred_check_branch
          %271 = sbr.rel (%p269) target = $region36
        $region35: #{tpu_custom_call.1} parent=27 // pred_region
          %272 = dma.done %s265, 128
        $region36: #{tpu_custom_call.1} parent=27 // pred_fallthru
          _
        %s273 = sand.u32 %s59, 1
        %s274 = scalar_lea.sflag [#allocation3], %s273
        %s275 = sand.u32 %s59, 1
        %s276 = smul.addr %s275, 32
        %s277 = scalar_lea.vmem [#allocation2], %s276
        %p278 = pneg %p72
        %p279 = pneg %p69
        %s280 = sand.u32 %s89, 1
        %s281 = scalar_lea.sflag [#allocation6], %s280
        %s282 = sand.u32 %s89, 1
        %s283 = smul.addr %s282, 8
        %s284 = scalar_lea.vmem [#allocation5], %s283
        %p285 = pneg %p102
        %p286 = pneg %p99
        %p287 = pneg %p130
        %p288 = pneg %p127
        %s289 = sand.u32 %s117, 1
        %s290 = scalar_lea.sflag [#allocation4], %s289
        %s291 = sand.u32 %s117, 1
        %s292 = smul.addr %s291, 8
        %s293 = scalar_lea.vmem [#allocation7], %s292
        %p294 = pneg %p158
        %p295 = pneg %p155
        %s296 = sand.u32 %s28, 1
        %s297 = scalar_lea.sflag [#allocation9], %s296
        %s298 = sand.u32 %s145, 1
        %s299 = smul.addr %s298, 32
        %s300 = scalar_lea.vmem [#allocation8], %s299
        %p301 = pneg %p186
        %p302 = pneg %p183
        %s303 = sand.u32 %s28, 1
        %s304 = scalar_lea.sflag [#allocation9], %s303
        %s305 = sand.u32 %s173, 1
        %s306 = smul.addr %s305, 32
        %s307 = scalar_lea.vmem [#allocation10], %s306
        %s308 = sadd.s32 %s34, %s35
        %s309 = sadd.s32 %s34, %s35
        %p310 = scmp.eq.s32.totalorder %s35, 0
        // Predicated region
        $region37: #{tpu_custom_call.1} parent=27 // pred_check
          %p311 = pneg %p310
        $region38: #{tpu_custom_call.1} parent=27 // pred_check_branch
          %313 = sbr.rel (%p311) target = $region40
        $region39: #{tpu_custom_call.1} parent=27 // pred_region
          %314 = vst [vmem:[%s293] sm:$0xff] 0.0
          %315 = vst [vmem:[%s300] sm:$0xff] 0.0
          %316 = vst [vmem:[%s300 + $0x8] sm:$0xff] 0.0
          %317 = vst [vmem:[%s300 + $0x10] sm:$0xff] 0.0
          %318 = vst [vmem:[%s300 + $0x18] sm:$0xff] 0.0
          %319 = vst [vmem:[%s307] sm:$0xff] 0.0
          %320 = vst [vmem:[%s307 + $0x8] sm:$0xff] 0.0
          %321 = vst [vmem:[%s307 + $0x10] sm:$0xff] 0.0
          %322 = vst [vmem:[%s307 + $0x18] sm:$0xff] 0.0
        $region40: #{tpu_custom_call.1} parent=27 // pred_fallthru
          _
        %v323 = vld [vmem:[%s259] sm:$0xff]
        %v324 = vld [vmem:[%s259 + $0x8] sm:$0xff]
        %v325 = vld [vmem:[%s259 + $0x10] sm:$0xff]
        %v326 = vld [vmem:[%s259 + $0x18] sm:$0xff]
        %v327 = vld [vmem:[%s268] sm:$0xff]
        %v328 = vmax.f32 %v323, %v324
        %v329 = vmax.f32 %v325, %v326
        %v330 = vmax.f32 %v328, %v329
        %v331 = vsub.f32 %v323, %v330
        %v332 = vsub.f32 %v324, %v330
        %v333 = vsub.f32 %v325, %v330
        %v334 = vsub.f32 %v326, %v330
        %v335 = vmul.f32 %v331, 1.442695
        %v336 = vpow.pop %v335
        %v337 = vmul.f32 %v332, 1.442695
        %v338 = vpow.pop %v337
        %v339 = vmul.f32 %v333, 1.442695
        %v340 = vpow.pop %v339
        %v341 = vmul.f32 %v334, 1.442695
        %v342 = vpow.pop %v341
        %v343 = vadd.f32 %v336, %v338
        %v344 = vadd.f32 %v343, %v340
        %v345 = vadd.f32 %v344, %v342
        %v346 = vrcp.pop %v345
        %v347 = vmul.f32 %v345, %v346
        %v348 = vsub.f32 2.0, %v347
        %v349 = vmul.f32 %v346, %v348
        %v350 = vmul.f32 %v336, %v349
        %v351 = vmul.f32 %v338, %v349
        %v352 = vmul.f32 %v340, %v349
        %v353 = vmul.f32 %v342, %v349
        %v354 = vlog2.pop %v345
        %v355 = vmul.f32 %v354, 0.6931472
        %v356 = vadd.f32 %v330, %v355
        %vm357 = vcmp.eq.s32.totalorder %v327, 0
        %vm358 = vcmp.eq.s32.totalorder %v327, 1
        %vm359 = vcmp.eq.s32.totalorder %v327, 2
        %vm360 = vcmp.eq.s32.totalorder %v327, 3
        %v361 = vsel %vm357, %v323, 0.0
        %v362 = vsel %vm358, %v324, 0.0
        %v363 = vsel %vm359, %v325, 0.0
        %v364 = vsel %vm360, %v326, 0.0
        %v365 = vadd.f32 %v361, %v362
        %v366 = vadd.f32 %v365, %v363
        %v367 = vadd.f32 %v366, %v364
        %v368 = vsub.f32 %v356, %v367
        %vm369 = vcmp.ge.s32.totalorder %v327, 0
        %v370 = vsel %vm369, %v368, 0.0
        %v371 = vsel %vm369, 1, 0
        %vm372 = vcmp.eq.s32.totalorder %v371, 1
        %v373 = vsel %vm372, %v350, 0.0
        %v374 = vsel %vm372, %v351, 0.0
        %v375 = vsel %vm372, %v352, 0.0
        %v376 = vsel %vm372, %v353, 0.0
        %v377 = vld [vmem:[%s293] sm:$0xff]
        %v378 = vadd.f32 %v370, 0.0
        %v379 = vadd.f32 %v377, %v378
        %380 = vst [vmem:[%s293] sm:$0xff] %v379
        %v381 = vld [vmem:[%s300] sm:$0xff]
        %v382 = vld [vmem:[%s300 + $0x8] sm:$0xff]
        %v383 = vld [vmem:[%s300 + $0x10] sm:$0xff]
        %v384 = vld [vmem:[%s300 + $0x18] sm:$0xff]
        %v385 = vsel %vm357, %v373, 0.0
        %v386 = vsel %vm358, %v374, 0.0
        %v387 = vsel %vm359, %v375, 0.0
        %v388 = vsel %vm360, %v376, 0.0
        %v389 = vadd.f32 %v385, 0.0
        %v390 = vadd.f32 %v386, 0.0
        %v391 = vadd.f32 %v387, 0.0
        %v392 = vadd.f32 %v388, 0.0
        %v393 = vadd.f32 %v381, %v389
        %v394 = vadd.f32 %v382, %v390
        %v395 = vadd.f32 %v383, %v391
        %v396 = vadd.f32 %v384, %v392
        %397 = vst [vmem:[%s300] sm:$0xff] %v393
        %398 = vst [vmem:[%s300 + $0x8] sm:$0xff] %v394
        %399 = vst [vmem:[%s300 + $0x10] sm:$0xff] %v395
        %400 = vst [vmem:[%s300 + $0x18] sm:$0xff] %v396
        %v401 = vld [vmem:[%s307] sm:$0xff]
        %v402 = vld [vmem:[%s307 + $0x8] sm:$0xff]
        %v403 = vld [vmem:[%s307 + $0x10] sm:$0xff]
        %v404 = vld [vmem:[%s307 + $0x18] sm:$0xff]
        %v405 = vadd.f32 %v373, 1.0
        %v406 = vadd.f32 %v374, 1.0
        %v407 = vadd.f32 %v375, 1.0
        %v408 = vadd.f32 %v376, 1.0
        %v409 = vsel %vm357, %v405, %v373
        %v410 = vsel %vm358, %v406, %v374
        %v411 = vsel %vm359, %v407, %v375
        %v412 = vsel %vm360, %v408, %v376
        %v413 = vadd.f32 %v409, 0.0
        %v414 = vadd.f32 %v410, 0.0
        %v415 = vadd.f32 %v411, 0.0
        %v416 = vadd.f32 %v412, 0.0
        %v417 = vadd.f32 %v401, %v413
        %v418 = vadd.f32 %v402, %v414
        %v419 = vadd.f32 %v403, %v415
        %v420 = vadd.f32 %v404, %v416
        %421 = vst [vmem:[%s307] sm:$0xff] %v417
        %422 = vst [vmem:[%s307 + $0x8] sm:$0xff] %v418
        %423 = vst [vmem:[%s307 + $0x10] sm:$0xff] %v419
        %424 = vst [vmem:[%s307 + $0x18] sm:$0xff] %v420
        %s425 = sand.u32 %s117, 1
        %s426 = scalar_lea.sflag [#allocation4], %s425
        %s427 = sand.u32 %s117, 1
        %s428 = smul.addr %s427, 8
        %s429 = scalar_lea.vmem [#allocation7], %s428
        %s430 = sand.u32 %s28, 1
        %s431 = scalar_lea.sflag [#allocation9], %s430
        %s432 = sand.u32 %s145, 1
        %s433 = smul.addr %s432, 32
        %s434 = scalar_lea.vmem [#allocation8], %s433
        %s435 = sand.u32 %s28, 1
        %s436 = scalar_lea.sflag [#allocation9], %s435
        %s437 = sand.u32 %s173, 1
        %s438 = smul.addr %s437, 32
        %s439 = scalar_lea.vmem [#allocation10], %s438
        // Predicated region
        $region41: #{tpu_custom_call.1} parent=27 // pred_check
          %p440 = pneg %p127
        $region42: #{tpu_custom_call.1} parent=27 // pred_check_branch
          %442 = sbr.rel (%p440) target = $region44
        $region43: #{tpu_custom_call.1} parent=27 // pred_region
          %s444 = ssub.s32 128, 128
          %445 = vsyncadd %s426, %s444
          %s446 = sadd.s32 %s34, %s33
          %s447 = smul.addr %s446, 128
          %s448 = scalar_lea.hbm %s2, %s447
          %s450 = sshll.u32 %s429, 4
          %s451 = int_to_ptr.vmem [resolvable:$true] %s450
          %453 = dma.vmem_to_hbm [thread:$0]  %s451, 128, %s448, %s426
        $region44: #{tpu_custom_call.1} parent=27 // pred_fallthru
          _
        // Predicated region
        $region45: #{tpu_custom_call.1} parent=27 // pred_check
          %p454 = pneg %p155
        $region46: #{tpu_custom_call.1} parent=27 // pred_check_branch
          %456 = sbr.rel (%p454) target = $region48
        $region47: #{tpu_custom_call.1} parent=27 // pred_region
          %s458 = ssub.s32 512, 512
          %459 = vsyncadd %s431, %s458
          %s460 = smul.addr %s34, 4
          %s461 = smul.addr %s33, 4
          %s462 = sadd.s32 %s460, %s461
          %s463 = smul.addr %s462, 128
          %s464 = scalar_lea.hbm %s3, %s463
          %s465 = sshll.u32 %s434, 4
          %s466 = int_to_ptr.vmem [resolvable:$true] %s465
          %471 = dma.vmem_to_hbm [thread:$0]  %s466, 512, %s464, %s431, 128, 128, 8
        $region48: #{tpu_custom_call.1} parent=27 // pred_fallthru
          _
        // Predicated region
        $region49: #{tpu_custom_call.1} parent=27 // pred_check
          %p472 = pneg %p183
        $region50: #{tpu_custom_call.1} parent=27 // pred_check_branch
          %474 = sbr.rel (%p472) target = $region52
        $region51: #{tpu_custom_call.1} parent=27 // pred_region
          %s476 = ssub.s32 512, 512
          %477 = vsyncadd %s436, %s476
          %s478 = smul.addr %s34, 4
          %s479 = smul.addr %s33, 4
          %s480 = sadd.s32 %s478, %s479
          %s481 = smul.addr %s480, 128
          %s482 = scalar_lea.hbm %s4, %s481
          %s483 = sshll.u32 %s439, 4
          %s484 = int_to_ptr.vmem [resolvable:$true] %s483
          %489 = dma.vmem_to_hbm [thread:$0]  %s484, 512, %s482, %s436, 128, 128, 8
        $region52: #{tpu_custom_call.1} parent=27 // pred_fallthru
          _
      $region28: #{tpu_custom_call.1} parent=5 // pred_fallthru
        _
      %p490 = scmp.le.s32.totalorder 2, %s23
      // Predicated region
      $region53: #{tpu_custom_call.1} parent=5 // pred_check
        %p491 = pneg %p490
      $region54: #{tpu_custom_call.1} parent=5 // pred_check_branch
        %493 = sbr.rel (%p491) target = $region56
      $region55: #{tpu_custom_call.1} parent=5 // pred_region
        %s494 = ssub.s32 %s23, 2
        // Predicated region
        $region57: #{tpu_custom_call.1} parent=55 // pred_check
          %p495 = pneg %p133
        $region58: #{tpu_custom_call.1} parent=55 // pred_check_branch
          %497 = sbr.rel (%p495) target = $region60
        $region59: #{tpu_custom_call.1} parent=55 // pred_region
          %s498 = sand.u32 %s118, 1
          %s499 = scalar_lea.sflag [#allocation4], %s498
          %s500 = sand.u32 %s118, 1
          %s501 = smul.addr %s500, 8
          %s502 = scalar_lea.vmem [#allocation7], %s501
          %503 = dma.done %s499, 128
        $region60: #{tpu_custom_call.1} parent=55 // pred_fallthru
          _
        // Predicated region
        $region61: #{tpu_custom_call.1} parent=55 // pred_check
          %p504 = pneg %p161
        $region62: #{tpu_custom_call.1} parent=55 // pred_check_branch
          %506 = sbr.rel (%p504) target = $region64
        $region63: #{tpu_custom_call.1} parent=55 // pred_region
          %s507 = sand.u32 %s29, 1
          %s508 = scalar_lea.sflag [#allocation9], %s507
          %s509 = sand.u32 %s146, 1
          %s510 = smul.addr %s509, 32
          %s511 = scalar_lea.vmem [#allocation8], %s510
          %512 = dma.done %s508, 512
        $region64: #{tpu_custom_call.1} parent=55 // pred_fallthru
          _
        // Predicated region
        $region65: #{tpu_custom_call.1} parent=55 // pred_check
          %p513 = pneg %p189
        $region66: #{tpu_custom_call.1} parent=55 // pred_check_branch
          %515 = sbr.rel (%p513) target = $region68
        $region67: #{tpu_custom_call.1} parent=55 // pred_region
          %s516 = sand.u32 %s29, 1
          %s517 = scalar_lea.sflag [#allocation9], %s516
          %s518 = sand.u32 %s174, 1
          %s519 = smul.addr %s518, 32
          %s520 = scalar_lea.vmem [#allocation10], %s519
          %521 = dma.done %s517, 512
        $region68: #{tpu_custom_call.1} parent=55 // pred_fallthru
          _
      $region56: #{tpu_custom_call.1} parent=5 // pred_fallthru
        _
    $region6: #{tpu_custom_call.1} parent=1 // loop_footer
      %s27 = sadd.s32 1, %s23
    $region7: #{tpu_custom_call.1} parent=1 // loop_footer_branch
      %22 = sbr.rel target = $region3
    $region8: #{tpu_custom_call.1} parent=1 // loop_exit
      _
    %522 = vsyncpa [#allocation3], 1
    %s523 = scalar_lea.sflag [#allocation3], 1
    %524 = vsyncpa %s523, 1
    %525 = vsyncpa [#allocation6], 1
    %s526 = scalar_lea.sflag [#allocation6], 1
    %527 = vsyncpa %s526, 1
    %528 = vsyncpa [#allocation4], 1
    %s529 = scalar_lea.sflag [#allocation4], 1
    %530 = vsyncpa %s529, 1
    %531 = vsyncpa [#allocation9], 1
    %s532 = scalar_lea.sflag [#allocation9], 1
    %533 = vsyncpa %s532, 1

</llo_original>
